<compile_context>
chip_gen: v5e
topology: v5e:2x2
jax: 0.10.0
libtpu: 0.0.40
codegen_flags: <defaults>
</compile_context>

<pallas_src>
import functools

import jax
import jax.numpy as jnp
from jax.experimental import pallas as pl
from jax.experimental.pallas import tpu as pltpu


# VMEM planning constants (sized so the same defaults fit v7x's 64 MiB VMEM).
_VMEM_LIMIT = 48 * 1024 * 1024    # explicit scoped-VMEM limit for the kernel
_VMEM_BUDGET = 40 * 1024 * 1024   # planning budget for double-buffered tiles
_W_BUDGET = 16 * 1024 * 1024      # budget for the double-buffered weight tile


def _round_up(x, m):
    return (x + m - 1) // m * m


def _pick_tile_o(o_pad, d, w_item, budget=_W_BUDGET):
    """Largest multiple-of-128 divisor of o_pad whose double-buffered weight fits."""
    if 2 * d * o_pad * w_item <= budget:
        return o_pad
    t = o_pad - 128
    while t > 128:
        if o_pad % t == 0 and 2 * d * t * w_item <= budget:
            return t
        t -= 128
    return 128


def _pick_tile_n(n, k, d, tile_o, x_item, o_item, budget):
    """Node-tile size: multiple of 8, <= 512, fits the remaining VMEM budget.

    Leaves headroom for the f32 accumulator / matmul result the compiler keeps
    as internal scratch (the _VMEM_LIMIT vs _VMEM_BUDGET slack).
    """
    per_row = 2 * (k * d * x_item + tile_o * o_item)   # double-buffered in + out
    t = min(512, _round_up(n, 8))
    t = max(8, (t // 8) * 8)
    while t > 8 and t * per_row > budget:
        t = max(8, ((t // 2) // 8) * 8)
    return t


def _aggregator_kernel(*refs, aggr_method, num_neighbors, input_dim, has_bias):
    """Compute one (tile_n, tile_o) output tile.

    refs (has_bias=True):  x_ref, w_ref, b_ref, o_ref
    refs (has_bias=False): x_ref, w_ref, o_ref

    x_ref: (tile_n, K*D)  neighbor features, flattened along (K, D)
    w_ref: (D, tile_o)    weight tile (resident across node tiles when o fits)
    b_ref: (1, tile_o)    f32 bias tile (only when the layer has a bias)
    o_ref: (tile_n, tile_o)
    """
    if has_bias:
        x_ref, w_ref, b_ref, o_ref = refs
    else:
        x_ref, w_ref, o_ref = refs
        b_ref = None

    K, D = num_neighbors, input_dim

    # Neighbor reduction as K unrolled D-wide lane slices, accumulated in f32.
    # Sequential accumulation keeps exactly one (tile_n, D) f32 value live, so
    # vreg pressure stays flat regardless of K; each slice is cast individually
    # -> no full (tile_n, K*D) f32 materialization.
    acc = x_ref[:, 0:D].astype(jnp.float32)
    if aggr_method in ("mean", "sum"):
        for k in range(1, K):
            acc = acc + x_ref[:, k * D:(k + 1) * D].astype(jnp.float32)
        if aggr_method == "mean":
            acc = acc * jnp.float32(1.0 / K)
    else:  # "max" (validated in the wrapper)
        for k in range(1, K):
            acc = jnp.maximum(acc, x_ref[:, k * D:(k + 1) * D].astype(jnp.float32))

    w = w_ref[...]
    # Feed the MXU in the weight's native dtype (bf16 MXU on v6e/v7x), f32 acc.
    lhs = acc if w.dtype == jnp.float32 else acc.astype(w.dtype)
    out = jnp.dot(lhs, w, preferred_element_type=jnp.float32)
    if has_bias:
        out = out + b_ref[...]                      # fused bias, added in f32
    o_ref[...] = out.astype(o_ref.dtype)


def neighbor_aggregator(neighbor_feature, weight, bias=None,
                        aggr_method="mean", tile_n=None, tile_o=None):
    """Pallas implementation of NeighborAggregator.forward.

    neighbor_feature: (N, K, D)
    weight:           (D, O)
    bias:             (O,) or None
    returns:          (N, O)
    """
    if aggr_method not in ("mean", "sum", "max"):
        raise ValueError("Unknown aggr type, expected sum, max, or mean")

    N, K, D = neighbor_feature.shape
    D2, O = weight.shape
    assert D == D2, "weight must be (input_dim, output_dim)"
    has_bias = bias is not None
    out_dtype = jnp.result_type(neighbor_feature.dtype, weight.dtype)

    x_item = jnp.dtype(neighbor_feature.dtype).itemsize
    w_item = jnp.dtype(weight.dtype).itemsize
    o_item = jnp.dtype(out_dtype).itemsize

    # Lane-dense output: pad output_dim up to a multiple of 128.
    o_pad = _round_up(O, 128)

    # Tile output_dim so the (double-buffered) weight tile stays modest.
    if tile_o is None:
        tile_o = _pick_tile_o(o_pad, D, w_item)
    assert o_pad % tile_o == 0 and tile_o % 128 == 0

    # Node tile sized against the remaining VMEM budget (v7x-safe).
    if tile_n is None:
        tile_n = _pick_tile_n(N, K, D, tile_o, x_item, o_item,
                              budget=_VMEM_BUDGET - 2 * D * tile_o * w_item)
    n_pad = _round_up(N, tile_n)

    # Wrapper-side layout plumbing (reshape is free; pads are zero-filled and
    # the padded rows/cols are sliced off the result).
    x2d = neighbor_feature.reshape(N, K * D)
    if n_pad != N:
        x2d = jnp.pad(x2d, ((0, n_pad - N), (0, 0)))
    w = weight if o_pad == O else jnp.pad(weight, ((0, 0), (0, o_pad - O)))

    operands = [x2d, w]
    in_specs = [
        # Neighbor features: advance with the node tile, constant along the
        # (innermost) output axis -> DMA'd from HBM exactly once.
        pl.BlockSpec((tile_n, K * D), lambda i, j: (i, 0)),
        # Weight tile: constant along the node axis -> stays resident when the
        # whole output dim fits in a single tile (common case).
        pl.BlockSpec((D, tile_o), lambda i, j: (0, j)),
    ]
    if has_bias:
        b2d = bias.reshape(1, O).astype(jnp.float32)
        if o_pad != O:
            b2d = jnp.pad(b2d, ((0, 0), (0, o_pad - O)))
        operands.append(b2d)
        in_specs.append(pl.BlockSpec((1, tile_o), lambda i, j: (0, j)))

    kernel = functools.partial(_aggregator_kernel, aggr_method=aggr_method,
                               num_neighbors=K, input_dim=D, has_bias=has_bias)

    # Advisory cost estimate for XLA's scheduler around the custom call.
    bytes_accessed = (x2d.size * x_item + w.size * w_item
                      + n_pad * o_pad * o_item
                      + (o_pad * 4 if has_bias else 0))
    cost = pl.CostEstimate(
        flops=2 * n_pad * D * o_pad + n_pad * (K - 1) * D,
        transcendentals=0,
        bytes_accessed=bytes_accessed,
    )

    grid = (n_pad // tile_n, o_pad // tile_o)
    out = pl.pallas_call(
        kernel,
        out_shape=jax.ShapeDtypeStruct((n_pad, o_pad), out_dtype),
        grid_spec=pltpu.PrefetchScalarGridSpec(
            num_scalar_prefetch=0,
            grid=grid,
            in_specs=in_specs,
            out_specs=pl.BlockSpec((tile_n, tile_o), lambda i, j: (i, j)),
        ),
        compiler_params=pltpu.CompilerParams(
            dimension_semantics=("parallel", "parallel"),
            vmem_limit_bytes=_VMEM_LIMIT,
        ),
        cost_estimate=cost,
        # TODO(synk): bump in_specs[0] to pipeline_mode=pl.Buffered(3) on v7x if
        # a trace shows exposed input DMA after retiling.
    )(*operands)

    if n_pad != N or o_pad != O:
        out = out[:N, :O]
    return out


def kaiming_uniform(key, shape, dtype=jnp.float32):
    # Matches torch.nn.init.kaiming_uniform_ defaults: bound = sqrt(6 / fan_in).
    fan_in = shape[0]
    bound = jnp.sqrt(6.0 / fan_in)
    return jax.random.uniform(key, shape, dtype, minval=-bound, maxval=bound)


if __name__ == "__main__":
    key = jax.random.PRNGKey(0)
    k_x, k_w, k_b, k_x2 = jax.random.split(key, 4)

    # Case set 1: small, "nice" shapes (module defaults: use_bias=False, mean).
    num_nodes, num_neighbors = 8, 4
    input_dim, output_dim = 32, 32
    neighbor_feature = jax.random.normal(
        k_x, (num_nodes, num_neighbors, input_dim), dtype=jnp.float32
    )
    weight = kaiming_uniform(k_w, (input_dim, output_dim))
    bias = jax.random.normal(k_b, (output_dim,), dtype=jnp.float32)

    # Case set 2: ragged shapes that exercise node + output-dim padding paths.
    num_nodes2, num_neighbors2 = 20, 5
    input_dim2, output_dim2 = 24, 40
    neighbor_feature2 = jax.random.normal(
        k_x2, (num_nodes2, num_neighbors2, input_dim2), dtype=jnp.float32
    )
    weight2 = kaiming_uniform(k_w, (input_dim2, output_dim2))
    bias2 = jax.random.normal(k_b, (output_dim2,), dtype=jnp.float32)

    cases = [
        (neighbor_feature, weight, None, "mean"),    # module default config
        (neighbor_feature, weight, bias, "sum"),
        (neighbor_feature, weight, bias, "max"),
        (neighbor_feature2, weight2, None, "mean"),
        (neighbor_feature2, weight2, bias2, "max"),
    ]
    for nf, w, b, aggr_method in cases:
        out = neighbor_aggregator(nf, w, b, aggr_method)
        out = jax.block_until_ready(out)

        if aggr_method == "mean":
            aggr_ref = nf.mean(axis=1)
        elif aggr_method == "sum":
            aggr_ref = nf.sum(axis=1)
        else:
            aggr_ref = nf.max(axis=1)
        ref = jnp.matmul(aggr_ref, w)
        if b is not None:
            ref = ref + b

        assert out.shape == (nf.shape[0], w.shape[1]), (out.shape, aggr_method)
        assert jnp.allclose(out, ref, atol=1e-5, rtol=1e-5), aggr_method

    print("KERNEL_OK")
</pallas_src>

<mosaic_0001>
module attributes {stable_mosaic.version = 11 : i64} {
  func.func @_aggregator_kernel(%arg0: i32, %arg1: i32, %arg2: memref<8x128xf32, #tpu.memory_space<vmem>>, %arg3: memref<32x128xf32, #tpu.memory_space<vmem>>, %arg4: memref<8x128xf32, #tpu.memory_space<vmem>>) attributes {dimension_semantics = [#tpu.dimension_semantics<parallel>, #tpu.dimension_semantics<parallel>], iteration_bounds = array<i64: 1, 1>, scalar_prefetch = 0 : i64, scratch_operands = 0 : i64, tpu.core_type = #tpu.core_type<tc>, window_params = [{transform_indices = @transform_0, window_bounds = array<i64: 8, 128>}, {transform_indices = @transform_1, window_bounds = array<i64: 32, 128>}, {transform_indices = @transform_2, window_bounds = array<i64: 8, 128>}]} {
    %c0 = arith.constant 0 : index
    %c0_0 = arith.constant 0 : index
    %0 = vector.load %arg2[%c0, %c0_0] : memref<8x128xf32, #tpu.memory_space<vmem>>, vector<8x32xf32>
    %c0_1 = arith.constant 0 : index
    %c32 = arith.constant 32 : index
    %1 = vector.load %arg2[%c0_1, %c32] : memref<8x128xf32, #tpu.memory_space<vmem>>, vector<8x32xf32>
    %2 = arith.addf %0, %1 : vector<8x32xf32>
    %c0_2 = arith.constant 0 : index
    %c64 = arith.constant 64 : index
    %3 = vector.load %arg2[%c0_2, %c64] : memref<8x128xf32, #tpu.memory_space<vmem>>, vector<8x32xf32>
    %4 = arith.addf %2, %3 : vector<8x32xf32>
    %c0_3 = arith.constant 0 : index
    %c96 = arith.constant 96 : index
    %5 = vector.load %arg2[%c0_3, %c96] : memref<8x128xf32, #tpu.memory_space<vmem>>, vector<8x32xf32>
    %6 = arith.addf %4, %5 : vector<8x32xf32>
    %cst = arith.constant 2.500000e-01 : f32
    %7 = vector.broadcast %cst : f32 to vector<8x32xf32>
    %8 = arith.mulf %6, %7 : vector<8x32xf32>
    %c0_4 = arith.constant 0 : index
    %c0_5 = arith.constant 0 : index
    %9 = vector.load %arg3[%c0_4, %c0_5] : memref<32x128xf32, #tpu.memory_space<vmem>>, vector<32x128xf32>
    %cst_6 = arith.constant dense<0.000000e+00> : vector<8x128xf32>
    %10 = tpu.matmul %8, %9, %cst_6 {dimension_numbers = #tpu.dot_dimension_numbers<[1], [0], [0], [1], [0, 0, 1, 1], [], []>} : vector<8x32xf32>, vector<32x128xf32>, vector<8x128xf32> -> vector<8x128xf32>
    %c0_7 = arith.constant 0 : index
    %c0_8 = arith.constant 0 : index
    %11 = vector.load %arg4[%c0_7, %c0_8] : memref<8x128xf32, #tpu.memory_space<vmem>>, vector<8x128xf32>
    tpu.vector_store %arg4[%c0_7, %c0_8], %10 {strides = array<i32>} : memref<8x128xf32, #tpu.memory_space<vmem>>, vector<8x128xf32>,
    return
  }
  func.func @transform_0(%arg0: i32, %arg1: i32) -> (i32, i32) {
    %c0_i32 = arith.constant 0 : i32
    %c0_i32_0 = arith.constant 0 : i32
    return %arg0, %c0_i32 : i32, i32
  }
  func.func @transform_1(%arg0: i32, %arg1: i32) -> (i32, i32) {
    %c0_i32 = arith.constant 0 : i32
    %c0_i32_0 = arith.constant 0 : i32
    return %c0_i32, %arg1 : i32, i32
  }
  func.func @transform_2(%arg0: i32, %arg1: i32) -> (i32, i32) {
    %c0_i32 = arith.constant 0 : i32
    return %arg0, %arg1 : i32, i32
  }
}

</mosaic_0001>

<llo_original>
// kernel: tpu_custom_call.1
$region0: #{tpu_custom_call.1}
  #allocation0 [shape = 'u32[]', space=smem, size = 0x4, offset = 0x4, fixed_abs, tag = 'smem constant byte address 0x4 - core index']
  #allocation1 [shape = 'u32[72,128]{1,0:T(1,128)}', space=vmem, size = 0x9000, scoped, tag = 'internal scratch']
  %s0 = inlined_call_operand.hbm [shape: f32[8,128], index: 0, kind: input, shape index: {}]
  %s1 = inlined_call_operand.hbm [shape: f32[32,128], index: 1, kind: input, shape index: {}]
  %s2 = inlined_call_operand.hbm [shape: f32[8,128], index: 2, kind: output, shape index: {}]
  %s3 = sld [smem:[#allocation0]]
  $region26: #{tpu_custom_call.1} parent=0
    _
  %s5 = ssub.s32 1, %s3
  %s6 = scalar_select 0, %s5, %s3
  $region1: #{tpu_custom_call.1} parent=0
    #allocation2 [shape = 'u8[4096]{0}', space=vmem, size = 0x1000, scoped, tag = 'input window, operand 0, single buffered']
    #allocation3 [shape = 's32[1]{0}', space=sflag, size = 0x4, scoped, tag = 'scoped memory for tpu_custom_call.1']
    #allocation4 [shape = 's32[1]{0}', space=sflag, size = 0x4, scoped, tag = 'scoped memory for tpu_custom_call.1']
    #allocation5 [shape = 'u8[16384]{0}', space=vmem, size = 0x4000, scoped, tag = 'input window, operand 1, single buffered']
    #allocation6 [shape = 's32[1]{0}', space=sflag, size = 0x4, scoped, tag = 'scoped memory for tpu_custom_call.1']
    #allocation7 [shape = 'u8[4096]{0}', space=vmem, size = 0x1000, scoped, tag = 'output window, operand 0, single buffered']
    %7 = vsyncpa [#allocation3], 0
    %8 = vsyncpa [#allocation6], 0
    %9 = vsyncpa [#allocation4], 0
    // Predicated region
    $region2: #{tpu_custom_call.1} parent=1 // pred_check
      _
    $region3: #{tpu_custom_call.1} parent=1 // pred_check_branch
      %11 = sbr.rel (0) target = $region5
    $region4: #{tpu_custom_call.1} parent=1 // pred_region
      %13 = vsyncadd [#allocation3], 0
      %s15 = sshll.u32 %s0, 4
      %s16 = int_to_ptr.hbm [resolvable:$true] %s15
      %s17 = sshll.u32 [#allocation2], 4
      %s18 = int_to_ptr.vmem [resolvable:$true] %s17
      %20 = dma.hbm_to_vmem [thread:$0]  %s16, 128, %s18, [#allocation3]
    $region5: #{tpu_custom_call.1} parent=1 // pred_fallthru
      _
    // Predicated region
    $region6: #{tpu_custom_call.1} parent=1 // pred_check
      _
    $region7: #{tpu_custom_call.1} parent=1 // pred_check_branch
      %22 = sbr.rel (0) target = $region9
    $region8: #{tpu_custom_call.1} parent=1 // pred_region
      %24 = vsyncadd [#allocation6], 0
      %s25 = sshll.u32 %s1, 4
      %s26 = int_to_ptr.hbm [resolvable:$true] %s25
      %s27 = sshll.u32 [#allocation5], 4
      %s28 = int_to_ptr.vmem [resolvable:$true] %s27
      %33 = dma.hbm_to_vmem [thread:$0]  %s26, 512, %s28, [#allocation6], 128, 128, 8
    $region9: #{tpu_custom_call.1} parent=1 // pred_fallthru
      _
    // Predicated region
    $region10: #{tpu_custom_call.1} parent=1 // pred_check
      _
    $region11: #{tpu_custom_call.1} parent=1 // pred_check_branch
      %35 = sbr.rel (0) target = $region13
    $region12: #{tpu_custom_call.1} parent=1 // pred_region
      %37 = dma.done [#allocation3], 128
    $region13: #{tpu_custom_call.1} parent=1 // pred_fallthru
      _
    // Predicated region
    $region14: #{tpu_custom_call.1} parent=1 // pred_check
      _
    $region15: #{tpu_custom_call.1} parent=1 // pred_check_branch
      %39 = sbr.rel (0) target = $region17
    $region16: #{tpu_custom_call.1} parent=1 // pred_region
      %41 = dma.done [#allocation6], 512
    $region17: #{tpu_custom_call.1} parent=1 // pred_fallthru
      _
    %v42 = vld [vmem:[#allocation2] sm:$0xff]
    %44 = vrot.lane.b32.xlu0 %v42, 96
    %v45 = vpop.permute.xlu0 %44
    %v47 = vadd.f32 %v42, %v45
    %48 = vrot.lane.b32.xlu0 %v42, 64
    %v49 = vpop.permute.xlu0 %48
    %v51 = vadd.f32 %v47, %v49
    %52 = vrot.lane.b32.xlu0 %v42, 32
    %v53 = vpop.permute.xlu0 %52
    %v55 = vadd.f32 %v51, %v53
    %v56 = vmul.f32 %v55, 0.25
    %v57 = vld [vmem:[#allocation5] sm:$0xff]
    %v58 = vld [vmem:[#allocation5 + $0x8] sm:$0xff]
    %v59 = vld [vmem:[#allocation5 + $0x10] sm:$0xff]
    %v60 = vld [vmem:[#allocation5 + $0x18] sm:$0xff]
    %vm61 = vcmask 261120
    %v63 = vsel %vm61, %v56, 0
    %65 = vmatpush.msra.mxu0 0.0
    %66 = vmatpush.msra.mxu0 0.0
    %67 = vmatpush.msra.mxu0 0.0
    %68 = vmatpush.msra.mxu0 0.0
    %69 = vmatpush.msra.mxu0 0.0
    %70 = vmatpush.msra.mxu0 0.0
    %71 = vmatpush.msra.mxu0 0.0
    %72 = vmatpush.msra.mxu0 0.0
    %73 = vmatpush.msra.mxu0 0.0
    %74 = vmatpush.msra.mxu0 0.0
    %75 = vmatpush.msra.mxu0 0.0
    %76 = vmatpush.msra.mxu0 0.0
    %77 = vmatpush.msra.mxu0 %v60
    %78 = vmatpush.msra.mxu0 %v59
    %79 = vmatpush.msra.mxu0 %v58
    %80 = vmatpush.msra.mxu0 %v57
    %81 = vmatmul.f32.gmra.mxu0 %v63
    %v82 = vpop.f32.mrf.mxu0
    %v83 = vadd.f32 0.0, %v82
    %84 = vdwg.mxu0
    %85 = vst [vmem:[#allocation7] sm:$0xff] %v83
    // Predicated region
    $region18: #{tpu_custom_call.1} parent=1 // pred_check
      _
    $region19: #{tpu_custom_call.1} parent=1 // pred_check_branch
      %87 = sbr.rel (0) target = $region21
    $region20: #{tpu_custom_call.1} parent=1 // pred_region
      %89 = vsyncadd [#allocation4], 0
      %s91 = sshll.u32 [#allocation7], 4
      %s92 = int_to_ptr.vmem [resolvable:$true] %s91
      %s93 = sshll.u32 %s2, 4
      %s94 = int_to_ptr.hbm [resolvable:$true] %s93
      %96 = dma.vmem_to_hbm [thread:$0]  %s92, 128, %s94, [#allocation4]
    $region21: #{tpu_custom_call.1} parent=1 // pred_fallthru
      _
    // Predicated region
    $region22: #{tpu_custom_call.1} parent=1 // pred_check
      _
    $region23: #{tpu_custom_call.1} parent=1 // pred_check_branch
      %98 = sbr.rel (0) target = $region25
    $region24: #{tpu_custom_call.1} parent=1 // pred_region
      %100 = dma.done [#allocation4], 128
    $region25: #{tpu_custom_call.1} parent=1 // pred_fallthru
      _
    %101 = vsyncpa [#allocation3], 1
    %102 = vsyncpa [#allocation6], 1
    %103 = vsyncpa [#allocation4], 1

</llo_original>
